<compile_context>
chip_gen: v7x
topology: tpu7x:2x2x1
jax: 0.10.0
libtpu: 0.0.40
codegen_flags: <defaults>
</compile_context>

<pallas_src>
import functools

import jax
import jax.numpy as jnp
from jax.experimental import pallas as pl
from jax.experimental.pallas import tpu as pltpu

PAD_TOKEN_INDEX = 0
UNK_TOKEN_INDEX = 1


def _round_up(x, m):
    return ((x + m - 1) // m) * m


def _vmem_budget_bytes():
    """~80% of this generation's physical per-core VMEM (v5e/v6e 128 MiB, v7x 64 MiB)."""
    try:
        cap = int(pltpu.get_tpu_info().vmem_capacity_bytes)
    except Exception:
        cap = 64 << 20          # conservative fallback: assume v7x-sized VMEM
    return int(cap) * 4 // 5


# --------------------------------------------------------------------------
# Path 1: small vocabulary — one-hot(ids) @ table on the MXU, table VMEM-resident
# --------------------------------------------------------------------------
def _onehot_gather_kernel(ids_ref, table_hbm, out_ref, w_vmem, sem, *, mat_dtype):
    """ids_ref  : (T_blk, 1) int32 token ids for this grid step (VMEM)
       table_hbm: (V, E) embedding table left in HBM (memory_space=ANY)
       out_ref  : (T_blk, E) output block
       w_vmem   : (V, E) single-buffered resident copy of the table
       sem      : DMA semaphore for the one-time table copy
    """
    # Copy the table HBM->VMEM exactly once; the scratch persists across the
    # whole grid.  Requires dimension_semantics=("arbitrary",) so that a single
    # core sees program_id(0) == 0.
    @pl.when(pl.program_id(0) == 0)
    def _():
        cp = pltpu.make_async_copy(table_hbm, w_vmem, sem)
        cp.start()
        cp.wait()

    ids = ids_ref[...]                                         # (T_blk, 1) int32
    rows = ids.shape[0]
    vocab = w_vmem.shape[0]
    lane_v = jax.lax.broadcasted_iota(jnp.int32, (rows, vocab), 1)
    onehot = (ids == lane_v).astype(mat_dtype)                 # single VPU compare
    acc = jnp.dot(onehot, w_vmem[...], preferred_element_type=jnp.float32)
    out_ref[...] = acc.astype(out_ref.dtype)


# --------------------------------------------------------------------------
# Path 2: large vocabulary — double-buffered per-row DMA gather, table stays in HBM
# --------------------------------------------------------------------------
def _row_dma_gather_kernel(ids_ref, table_hbm, out_ref, row_buf, sem, *,
                           tokens_per_block):
    """ids_ref  : (T_pad,) int32 token ids, scalar-prefetched into SMEM
       table_hbm: (V, E) embedding table left in HBM (memory_space=ANY)
       out_ref  : (T_blk, E) output block
       row_buf  : (2, 1, E) VMEM double buffer
       sem      : (2,) DMA semaphores
    """
    base = pl.program_id(0) * tokens_per_block

    def issue(t, slot):
        row = ids_ref[base + t]
        pltpu.make_async_copy(table_hbm.at[pl.ds(row, 1), :],
                              row_buf.at[slot], sem.at[slot]).start()

    issue(0, 0)

    @pl.loop(0, tokens_per_block)
    def _(t):
        slot = t & 1

        @pl.when(t + 1 < tokens_per_block)
        def _():
            issue(t + 1, 1 - slot)

        pltpu.make_async_copy(table_hbm.at[pl.ds(0, 1), :],
                              row_buf.at[slot], sem.at[slot]).wait()
        out_ref[pl.ds(t, 1), :] = row_buf[slot]


# --------------------------------------------------------------------------
# Wrapper
# --------------------------------------------------------------------------
def lut_embedding_lookup(token_ids, table, *, use_bf16_matmul=None, path=None,
                         max_tokens_per_block=8192):
    """out[b, s, :] = table[token_ids[b, s], :]  (nn.Embedding lookup, padding_idx=0).

    path: None (auto), "onehot" (small-vocab MXU path) or "gather" (row-DMA path).
    use_bf16_matmul: run the one-hot matmul with bf16 operands (~3x fewer MXU
      passes, half the table VMEM).  Exact only when the table values are
      bf16-representable; defaults to True only for bf16 tables.
    """
    B, S = token_ids.shape
    V, E = table.shape
    out_dtype = table.dtype
    out_it = jnp.dtype(out_dtype).itemsize
    T = B * S

    budget = _vmem_budget_bytes()

    if use_bf16_matmul is None:
        use_bf16_matmul = (table.dtype == jnp.bfloat16)
    mat_dtype = jnp.bfloat16 if use_bf16_matmul else jnp.float32
    mat_it = jnp.dtype(mat_dtype).itemsize

    # VMEM footprint estimates (minor dim pads to 128 lanes).
    E_pad = _round_up(E, 128)
    V_pad = _round_up(V, 128)
    table_resident_bytes = V * E_pad * mat_it      # single-buffered scratch copy

    if path is None:
        # One-hot path costs ~V MACs per output element and needs the table in
        # VMEM; past a couple thousand rows the row-DMA gather wins everywhere.
        path = "onehot" if (V <= 2048 and table_resident_bytes <= budget // 3) else "gather"

    # Invalid ids -> UNK (PyTorch would raise; clamping to V-1 fabricates data).
    # Also guards the row DMA / one-hot against out-of-bounds indices.
    flat_ids = token_ids.reshape(T).astype(jnp.int32)
    flat_ids = jnp.where((flat_ids >= 0) & (flat_ids < V), flat_ids,
                         jnp.int32(UNK_TOKEN_INDEX))

    if path == "onehot":
        # Cheap cast (no-op if dtypes already match); with a real module this
        # would be cached alongside the table rather than rebuilt per call.
        table_mat = table.astype(mat_dtype)

        # Tokens per grid step: fill the VMEM left after the resident table
        # (amortises the ~0.35us fixed per-step cost).
        per_token = (2 * E_pad * out_it        # double-buffered output tile
                     + 2 * 128 * 4             # double-buffered (T_blk, 1) ids tile
                     + V_pad * mat_it          # one-hot temporary
                     + E_pad * 4)              # f32 accumulator
        avail = max(budget - table_resident_bytes - (2 << 20), per_token * 8)
        t_blk = max((min(avail // per_token, max_tokens_per_block) // 8) * 8, 8)
        t_blk = min(t_blk, _round_up(T, 8))
        t_pad = _round_up(T, t_blk)
        n_blocks = t_pad // t_blk

        ids = flat_ids
        if t_pad > T:
            ids = jnp.concatenate(
                [ids, jnp.full((t_pad - T,), PAD_TOKEN_INDEX, jnp.int32)])
        ids2d = ids.reshape(t_pad, 1)

        cost = pl.CostEstimate(
            flops=2 * t_pad * V * E,
            transcendentals=0,
            bytes_accessed=t_pad * 4 + V * E * mat_it + t_pad * E * out_it)

        out = pl.pallas_call(
            functools.partial(_onehot_gather_kernel, mat_dtype=mat_dtype),
            grid_spec=pltpu.PrefetchScalarGridSpec(
                num_scalar_prefetch=0,
                grid=(n_blocks,),
                in_specs=[
                    pl.BlockSpec((t_blk, 1), lambda i: (i, 0)),   # ids block
                    pl.BlockSpec(memory_space=pl.ANY),            # table stays in HBM
                ],
                out_specs=pl.BlockSpec((t_blk, E), lambda i: (i, 0)),
                scratch_shapes=[
                    pltpu.VMEM((V, E), mat_dtype),                # resident table (1x, not 2x)
                    pltpu.SemaphoreType.DMA,
                ],
            ),
            out_shape=jax.ShapeDtypeStruct((t_pad, E), out_dtype),
            compiler_params=pltpu.CompilerParams(
                # "arbitrary": the one-time table copy is guarded on program_id==0,
                # and in this small-V regime a v7x core split would only double
                # the table HBM read and per-core VMEM footprint.
                dimension_semantics=("arbitrary",),
                vmem_limit_bytes=budget,
            ),
            cost_estimate=cost,
        )(ids2d, table_mat)

    else:  # "gather": per-token double-buffered row DMA, table never leaves HBM
        t_blk = max((min((budget // 4) // (E_pad * out_it), 1024) // 8) * 8, 8)
        t_blk = min(t_blk, _round_up(T, 8))
        t_pad = _round_up(T, t_blk)
        n_blocks = t_pad // t_blk

        ids1d = flat_ids
        if t_pad > T:
            ids1d = jnp.concatenate(
                [ids1d, jnp.full((t_pad - T,), PAD_TOKEN_INDEX, jnp.int32)])

        out = pl.pallas_call(
            functools.partial(_row_dma_gather_kernel, tokens_per_block=t_blk),
            grid_spec=pltpu.PrefetchScalarGridSpec(
                num_scalar_prefetch=1,                            # ids -> SMEM
                grid=(n_blocks,),
                in_specs=[pl.BlockSpec(memory_space=pl.ANY)],     # table stays in HBM
                out_specs=pl.BlockSpec((t_blk, E), lambda i, ids: (i, 0)),
                scratch_shapes=[
                    pltpu.VMEM((2, 1, E), out_dtype),
                    pltpu.SemaphoreType.DMA((2,)),
                ],
            ),
            out_shape=jax.ShapeDtypeStruct((t_pad, E), out_dtype),
            compiler_params=pltpu.CompilerParams(
                dimension_semantics=("parallel",),
                vmem_limit_bytes=budget,
            ),
        )(ids1d, table)

    # Row-slice off the token padding and view as (B, S, E).  Only the leading
    # dim is reshaped — no minor-dim (lane) relayout of the output.
    return out[:T].reshape(B, S, E)


def embeddings_lut_forward(token_ids, table, **lookup_kwargs):
    """Mirrors EmbeddingsLUT.forward for the non-BERT (clear_text=False) path:
    returns (embeddings, inputs, None)."""
    emb = lut_embedding_lookup(token_ids, table, **lookup_kwargs)
    return emb, token_ids, None


def init_embedding_table(key, vocab_size, embed_dim, dtype=jnp.float32):
    """Deterministic init matching nn.Embedding(..., padding_idx=0): normal(0,1)
    weights with the padding row zeroed.  Values are snapped to the bf16 grid so
    the bf16-operand MXU gather is bit-exact (and the table could also be served
    in bf16 with no extra error)."""
    table = jax.random.normal(key, (vocab_size, embed_dim), dtype=jnp.float32)
    table = table.astype(jnp.bfloat16).astype(dtype)
    table = table.at[PAD_TOKEN_INDEX].set(0.0)
    return table


if __name__ == "__main__":
    key = jax.random.PRNGKey(0)
    k_tab, k_ids = jax.random.split(key)

    B, S = 2, 8           # batch, sequence length
    V, E = 64, 32         # input_vocabulary_size, input_embeddings_size

    table = init_embedding_table(k_tab, V, E)
    token_ids = jax.random.randint(k_ids, (B, S), minval=0, maxval=V, dtype=jnp.int32)
    # make sure the padding index shows up, like a padded batch would
    token_ids = token_ids.at[0, -1].set(PAD_TOKEN_INDEX)
    token_ids = token_ids.at[1, -2:].set(PAD_TOKEN_INDEX)

    # plain-JAX reference of the nn.Embedding lookup
    ref = jnp.take(table, token_ids.reshape(-1), axis=0).reshape(B, S, E)

    # Primary small-vocab path: one-hot MXU gather with bf16 operands (exact here
    # because init_embedding_table snaps the table to the bf16 grid).
    emb, passthrough_inputs, none_field = embeddings_lut_forward(
        token_ids, table, use_bf16_matmul=True)
    emb = jax.block_until_ready(emb)

    assert emb.shape == (B, S, E)
    assert emb.dtype == table.dtype
    assert none_field is None
    assert bool(jnp.array_equal(passthrough_inputs, token_ids))
    assert bool(jnp.array_equal(emb, ref))
    # padding rows must be exactly zero (padding_idx=0 semantics)
    assert bool(jnp.all(emb[0, -1] == 0.0))
    assert bool(jnp.all(emb[1, -2:] == 0.0))

    # Large-vocab fallback path, forced on the same small table: row-DMA gather.
    emb_gather = lut_embedding_lookup(token_ids, table, path="gather")
    emb_gather = jax.block_until_ready(emb_gather)
    assert bool(jnp.array_equal(emb_gather, ref))

    print("KERNEL_OK")
</pallas_src>

<mosaic_0001>
module attributes {stable_mosaic.version = 11 : i64} {
  func.func @_onehot_gather_kernel(%arg0: i32, %arg1: memref<16x1xi32, #tpu.memory_space<vmem>>, %arg2: memref<64x32xbf16, #tpu.memory_space<any>>, %arg3: memref<16x32xf32, #tpu.memory_space<vmem>>, %arg4: memref<64x32xbf16, #tpu.memory_space<vmem>>, %arg5: memref<!tpu.dma_semaphore, #tpu.memory_space<semaphore_mem>>) attributes {dimension_semantics = [#tpu.dimension_semantics<arbitrary>], iteration_bounds = array<i64: 1>, scalar_prefetch = 0 : i64, scratch_operands = 2 : i64, tpu.core_type = #tpu.core_type<tc>, window_params = [{transform_indices = @transform_0, window_bounds = array<i64: 16, 1>}, {}, {transform_indices = @transform_2, window_bounds = array<i64: 16, 32>}]} {
    %c0_i32 = arith.constant 0 : i32
    %0 = arith.cmpi eq, %arg0, %c0_i32 : i32
    %1 = arith.extui %0 : i1 to i32
    %c0_i32_0 = arith.constant 0 : i32
    %2 = arith.cmpi ne, %1, %c0_i32_0 : i32
    scf.if %2 {
      tpu.enqueue_dma source(%arg2 : memref<64x32xbf16, #tpu.memory_space<any>>) target(%arg4 : memref<64x32xbf16, #tpu.memory_space<vmem>>) target_semaphore(%arg5 : memref<!tpu.dma_semaphore, #tpu.memory_space<semaphore_mem>>)
      tpu.wait_dma2 semaphore(%arg5 : memref<!tpu.dma_semaphore, #tpu.memory_space<semaphore_mem>>) src(%arg2 : memref<64x32xbf16, #tpu.memory_space<any>>) dst(%arg4 : memref<64x32xbf16, #tpu.memory_space<vmem>>)
    } else {
    }
    %c0 = arith.constant 0 : index
    %c0_1 = arith.constant 0 : index
    %3 = vector.load %arg1[%c0, %c0_1] : memref<16x1xi32, #tpu.memory_space<vmem>>, vector<16x1xi32>
    %4 = tpu.iota {dimensions = array<i32: 1>} : vector<16x64xi32>
    %5 = vector.broadcast %3 : vector<16x1xi32> to vector<16x64xi32>
    %6 = arith.cmpi eq, %5, %4 : vector<16x64xi32>
    %7 = arith.extui %6 : vector<16x64xi1> to vector<16x64xi32>
    %8 = arith.sitofp %7 : vector<16x64xi32> to vector<16x64xf32>
    %9 = arith.truncf %8 : vector<16x64xf32> to vector<16x64xbf16>
    %c0_2 = arith.constant 0 : index
    %c0_3 = arith.constant 0 : index
    %10 = vector.load %arg4[%c0_2, %c0_3] : memref<64x32xbf16, #tpu.memory_space<vmem>>, vector<64x32xbf16>
    %cst = arith.constant dense<0.000000e+00> : vector<16x32xf32>
    %11 = tpu.matmul %9, %10, %cst {dimension_numbers = #tpu.dot_dimension_numbers<[1], [0], [0], [1], [0, 0, 1, 1], [], []>} : vector<16x64xbf16>, vector<64x32xbf16>, vector<16x32xf32> -> vector<16x32xf32>
    %c0_4 = arith.constant 0 : index
    %c0_5 = arith.constant 0 : index
    %12 = vector.load %arg3[%c0_4, %c0_5] : memref<16x32xf32, #tpu.memory_space<vmem>>, vector<16x32xf32>
    tpu.vector_store %arg3[%c0_4, %c0_5], %11 {strides = array<i32>} : memref<16x32xf32, #tpu.memory_space<vmem>>, vector<16x32xf32>,
    return
  }
  func.func @transform_0(%arg0: i32) -> (i32, i32) {
    %c0_i32 = arith.constant 0 : i32
    %c0_i32_0 = arith.constant 0 : i32
    return %arg0, %c0_i32 : i32, i32
  }
  func.func @transform_2(%arg0: i32) -> (i32, i32) {
    %c0_i32 = arith.constant 0 : i32
    %c0_i32_0 = arith.constant 0 : i32
    return %arg0, %c0_i32 : i32, i32
  }
}

</mosaic_0001>

<llo_original>
// kernel: tpu_custom_call.1
$region0: #{tpu_custom_call.1}
  #allocation0 [shape = 'u32[]', space=smem, size = 0x4, offset = 0x4, fixed_abs, tag = 'smem constant byte address 0x4 - core index']
  #allocation1 [shape = 'u32[144,128]{1,0:T(1,128)}', space=vmem, size = 0x12000, scoped, tag = 'internal scratch']
  #allocation2 [shape = 'bf16[64,32]{1,0:T(16,128)(2,1)}', space=vmem, size = 0x4000, scoped, tag = 'scratch operand']
  #allocation3 [shape = 's32[1]{0}', space=sflag, size = 0x4, scoped, tag = 'scratch operand']
  #allocation6 [shape = 's32[]', space=sflag, size = 0x4, offset = 0, fixed_abs, tag = 'sflag constant byte address 0x0 - dummy sync flag']
  %s0 = inlined_call_operand.vmem [shape: s32[16,1], index: 0, kind: input, shape index: {}]
  %s1 = inlined_call_operand.vmem [shape: bf16[64,32], index: 1, kind: input, shape index: {}]
  %s2 = inlined_call_operand.hbm [shape: f32[16,32], index: 2, kind: output, shape index: {}]
  %s3 = sld [smem:[#allocation0]]
  $region52: #{tpu_custom_call.1} parent=0
    _
  %s5 = ssub.s32 1, %s3
  %s6 = scalar_select 0, %s5, %s3
  $region1: #{tpu_custom_call.1} parent=0
    #allocation4 [shape = 'u8[8192]{0}', space=vmem, size = 0x2000, scoped, tag = 'output window, operand 0, single buffered']
    #allocation5 [shape = 's32[1]{0}', space=sflag, size = 0x4, scoped, tag = 'scoped memory for tpu_custom_call.1']
    %7 = vsyncpa [#allocation5], 0
    // Predicated region
    $region2: #{tpu_custom_call.1} parent=1 // pred_check
      _
    $region3: #{tpu_custom_call.1} parent=1 // pred_check_branch
      %9 = sbr.rel (0) target = $region5
    $region4: #{tpu_custom_call.1} parent=1 // pred_region
      _
    $region5: #{tpu_custom_call.1} parent=1 // pred_fallthru
      _
    %p11 = scmp.eq.s32.totalorder 0, 0
    // Predicated region
    $region6: #{tpu_custom_call.1} parent=1 // pred_check
      %p12 = pneg %p11
    $region7: #{tpu_custom_call.1} parent=1 // pred_check_branch
      %14 = sbr.rel (%p12) target = $region9
    $region8: #{tpu_custom_call.1} parent=1 // pred_region
      %p16 = scmp.lt.u32.totalorder 32, 8
      %p17 = pneg %p16
      // Predicated region
      $region10: #{tpu_custom_call.1} parent=8 // pred_check
        _
      $region11: #{tpu_custom_call.1} parent=8 // pred_check_branch
        %19 = sbr.rel (%p16) target = $region13
      $region12: #{tpu_custom_call.1} parent=8 // pred_region
        %s34 = sand.u32 32, 7
        %p35 = scmp.eq.s32.totalorder %s34, 0
        // Predicated region
        $region25: #{tpu_custom_call.1} parent=12 // pred_check
          %p36 = pneg %p35
        $region26: #{tpu_custom_call.1} parent=12 // pred_check_branch
          %38 = sbr.rel (%p36) target = $region28
        $region27: #{tpu_custom_call.1} parent=12 // pred_region
          loop: start=0, step=1, limit=1
          $region29: #{tpu_custom_call.1} parent=27 // loop_pre_header
            _
          $region30: #{tpu_custom_call.1} parent=27 // loop_header
            %s40 = sphi 0, %s44
            %p41 = scmp.ge.s32.totalorder %s40, 1
            %s45 = sphi %s1, %s1
            %s46 = sphi [#allocation2], [#allocation2]
          $region31: #{tpu_custom_call.1} parent=27 // loop_header_branch
            %43 = sbr.rel (%p41) target = $region35
          $region32: #{tpu_custom_call.1} parent=27 // loop_body
            %v47 = vld [vmem:[%s45] sm:$0xff]
            %48 = vst [vmem:[%s46] sm:$0xff] %v47
            %v49 = vld [vmem:[%s45 + $0x8] sm:$0xff]
            %50 = vst [vmem:[%s46 + $0x8] sm:$0xff] %v49
            %v51 = vld [vmem:[%s45 + $0x10] sm:$0xff]
            %52 = vst [vmem:[%s46 + $0x10] sm:$0xff] %v51
            %v53 = vld [vmem:[%s45 + $0x18] sm:$0xff]
            %54 = vst [vmem:[%s46 + $0x18] sm:$0xff] %v53
          $region33: #{tpu_custom_call.1} parent=27 // loop_footer
            %s44 = sadd.s32 1, %s40
          $region34: #{tpu_custom_call.1} parent=27 // loop_footer_branch
            %39 = sbr.rel target = $region30
          $region35: #{tpu_custom_call.1} parent=27 // loop_exit
            _
        $region28: #{tpu_custom_call.1} parent=12 // pred_fallthru
          _
        %p55 = pneg %p35
        // Predicated region
        $region36: #{tpu_custom_call.1} parent=12 // pred_check
          _
        $region37: #{tpu_custom_call.1} parent=12 // pred_check_branch
          %57 = sbr.rel (%p35) target = $region39
        $region38: #{tpu_custom_call.1} parent=12 // pred_region
          %s58 = sand.u32 32, 7
        $region39: #{tpu_custom_call.1} parent=12 // pred_fallthru
          _
      $region13: #{tpu_custom_call.1} parent=8 // pred_fallthru
        _
      // Predicated region
      $region14: #{tpu_custom_call.1} parent=8 // pred_check
        %p20 = pneg %p16
      $region15: #{tpu_custom_call.1} parent=8 // pred_check_branch
        %22 = sbr.rel (%p20) target = $region17
      $region16: #{tpu_custom_call.1} parent=8 // pred_region
        %s23 = sshllo.u32 0, 32
        loop: start=0, step=1, limit=1
        $region18: #{tpu_custom_call.1} parent=16 // loop_pre_header
          _
        $region19: #{tpu_custom_call.1} parent=16 // loop_header
          %s25 = sphi 0, %s29
          %p26 = scmp.ge.s32.totalorder %s25, 1
          %s30 = sphi %s1, %s1
          %s31 = sphi [#allocation2], [#allocation2]
        $region20: #{tpu_custom_call.1} parent=16 // loop_header_branch
          %28 = sbr.rel (%p26) target = $region24
        $region21: #{tpu_custom_call.1} parent=16 // loop_body
          %v32 = vld [vmem:[%s30] sm:%s23]
          %33 = vst [vmem:[%s31] sm:%s23] %v32
        $region22: #{tpu_custom_call.1} parent=16 // loop_footer
          %s29 = sadd.s32 1, %s25
        $region23: #{tpu_custom_call.1} parent=16 // loop_footer_branch
          %24 = sbr.rel target = $region19
        $region24: #{tpu_custom_call.1} parent=16 // loop_exit
          _
      $region17: #{tpu_custom_call.1} parent=8 // pred_fallthru
        _
      // Predicated region
      $region40: #{tpu_custom_call.1} parent=8 // pred_check
        _
      $region41: #{tpu_custom_call.1} parent=8 // pred_check_branch
        %61 = sbr.rel (0) target = $region43
      $region42: #{tpu_custom_call.1} parent=8 // pred_region
        %62 = vsyncadd [#allocation3], 512
      $region43: #{tpu_custom_call.1} parent=8 // pred_fallthru
        _
      %s63 = smul.u32 4, 8
      %s64 = smul.u32 %s63, 1
      %s65 = sshll.u32 %s64, 4
      %66 = dma.done [#allocation3], %s65
    $region9: #{tpu_custom_call.1} parent=1 // pred_fallthru
      _
    %v67 = vld [vmem:[%s0] sm:$0xff]
    %v68 = vld [vmem:[%s0 + $0x8] sm:$0xff]
    %v69 = vlaneseq
    %v70 = vand.u32 %v69, 127
    %71 = vset.pattern.permute.xlu0 0
    %72 = vperm.xlu0 %71, %v67
    %v73 = vpop.permute.xlu0 %72
    %74 = vset.pattern.permute.xlu0 0
    %75 = vperm.xlu0 %74, %v68
    %v76 = vpop.permute.xlu0 %75
    %vm77 = vcmp.eq.s32.totalorder %v73, %v70
    %vm78 = vcmp.eq.s32.totalorder %v76, %v70
    %v79 = vsel %vm77, 1, 0
    %v80 = vsel %vm78, 1, 0
    %v81 = vcvt.s32.f32 %v79
    %v82 = vcvt.s32.f32 %v80
    %v83 = vpack.c.bf16 %v82, %v81
    %v84 = vld [vmem:[#allocation2] sm:$0xff]
    %v85 = vld [vmem:[#allocation2 + $0x8] sm:$0xff]
    %v86 = vld [vmem:[#allocation2 + $0x10] sm:$0xff]
    %v87 = vld [vmem:[#allocation2 + $0x18] sm:$0xff]
    %vm88 = vcmask 523264
    %v90 = vsel %vm88, %v83, 0
    %92 = vmatprep.subr.bf16.mxu0 0
    %93 = vmatpush1.bf16.msra.mxu0 %v84
    %94 = vmatprep.subr.bf16.mxu0 0
    %95 = vmatpush1.bf16.msra.mxu0 %v85
    %96 = vmatprep.subr.bf16.mxu0 0
    %97 = vmatpush1.bf16.msra.mxu0 %v86
    %98 = vmatprep.subr.bf16.mxu0 0
    %99 = vmatpush1.bf16.msra.mxu0 %v87
    %100 = vmatprep.subr.bf16.mxu0 0
    %101 = vmatpush1.bf16.msra.mxu0 0
    %102 = vmatprep.subr.bf16.mxu0 0
    %103 = vmatpush1.bf16.msra.mxu0 0
    %104 = vmatprep.subr.bf16.mxu0 0
    %105 = vmatpush1.bf16.msra.mxu0 0
    %106 = vmatprep.subr.bf16.mxu0 0
    %107 = vmatpush1.bf16.msra.mxu0 0
    %108 = vmatprep.subr.bf16.mxu0 0
    %109 = vmatpush1.bf16.msra.mxu0 0
    %110 = vmatprep.subr.bf16.mxu0 0
    %111 = vmatpush1.bf16.msra.mxu0 0
    %112 = vmatprep.subr.bf16.mxu0 0
    %113 = vmatpush1.bf16.msra.mxu0 0
    %114 = vmatprep.subr.bf16.mxu0 0
    %115 = vmatpush1.bf16.msra.mxu0 0
    %116 = vmatprep.subr.bf16.mxu0 0
    %117 = vmatpush1.bf16.msra.mxu0 0
    %118 = vmatprep.subr.bf16.mxu0 0
    %119 = vmatpush1.bf16.msra.mxu0 0
    %120 = vmatprep.subr.bf16.mxu0 0
    %121 = vmatpush1.bf16.msra.mxu0 0
    %122 = vmatprep.subr.bf16.mxu0 0
    %123 = vmatpush1.bf16.msra.mxu0 0
    %124 = vmatprep.mubr.bf16.mxu0 0
    %125 = vmatmul.mubr.bf16.gmra.mrb[0].mxu0 %v90
    %v126 = vpop.f32.mrb[0].mxu0
    %v127 = vadd.f32 0.0, %v126
    %v128 = vpop.f32.mrb[0].mxu0
    %v129 = vpop.f32.mrb[0].mxu0
    %v130 = vadd.f32 0.0, %v129
    %v131 = vpop.f32.mrb[0].mxu0
    %132 = vdwg.mxu0
    %vm133 = vcmask 261120
    %134 = vst.msk [vmem:[#allocation4] sm:$0xff] %vm133, %v127
    %135 = vst.msk [vmem:[#allocation4 + $0x8] sm:$0xff] %vm133, %v130
    // Predicated region
    $region44: #{tpu_custom_call.1} parent=1 // pred_check
      _
    $region45: #{tpu_custom_call.1} parent=1 // pred_check_branch
      %137 = sbr.rel (0) target = $region47
    $region46: #{tpu_custom_call.1} parent=1 // pred_region
      %s139 = ssub.s32 256, 256
      %140 = vsyncadd [#allocation5], %s139
      %s141 = sshll.u32 [#allocation4], 4
      %s142 = int_to_ptr.vmem [resolvable:$true] %s141
      %147 = dma.vmem_to_hbm [thread:$0]  %s142, 256, %s2, [#allocation5], 128, 128, 8
    $region47: #{tpu_custom_call.1} parent=1 // pred_fallthru
      _
    // Predicated region
    $region48: #{tpu_custom_call.1} parent=1 // pred_check
      _
    $region49: #{tpu_custom_call.1} parent=1 // pred_check_branch
      %149 = sbr.rel (0) target = $region51
    $region50: #{tpu_custom_call.1} parent=1 // pred_region
      %150 = dma.done [#allocation5], 256
    $region51: #{tpu_custom_call.1} parent=1 // pred_fallthru
      _
    %151 = vsyncpa [#allocation5], 1
  %152 = vsyncmov [#allocation3]
  %s153 = vpop.sfrf %152
  %p154 = scmp.eq.s32.totalorder %s153, 0
  %p155 = pneg %p154
  %157 = shalt.err (%p155)

</llo_original>
